<compile_context>
chip_gen: v6e
topology: v6e:2x2x1
jax: 0.10.0
libtpu: 0.0.40
codegen_flags: <defaults>
</compile_context>

<pallas_src>
import math

import jax
import jax.numpy as jnp
from jax.experimental import pallas as pl
from jax.experimental.pallas import tpu as pltpu


_EPS = 1e-6

_LANCZOS_G = 7.0
_LANCZOS_COEF = (
    0.99999999999980993,
    676.5203681218851,
    -1259.1392167224028,
    771.32342877765313,
    -176.61502916214059,
    12.507343278686905,
    -0.13857109526572012,
    9.9843695780195716e-6,
    1.5056327351493116e-7,
)
# Exact power-of-two rescale of every factor in the fused-lgamma products.
# s^3 appears on both sides of the log difference, so it cancels exactly
# (power-of-two multiplies are exact), while keeping the ~z^24 magnitudes
# representable in float32 up to alpha + beta ~ 2000.
_PROD_SCALE = 2.0 ** -40


# ---------------------------------------------------------------------------
# In-kernel math helpers (only exp/log/abs/max/min -> safe Mosaic lowerings)
# ---------------------------------------------------------------------------
def _softplus(x):
    # numerically-stable softplus: max(x, 0) + log(1 + exp(-|x|))
    return jnp.maximum(x, 0.0) + jnp.log(1.0 + jnp.exp(-jnp.abs(x)))


def _lanczos_parts(z):
    """Divide-free Lanczos pieces for z >= 1 (alpha, beta >= 1 here).

    Returns (P, den) such that
        lgamma(z) = 0.5*log(2*pi) + (z-0.5)*log(t) - t + log(P) - log(den),
        t = z - 1 + g + 0.5.
    The series sum_i c_i/(z-1+i) is kept as P/den via prefix/suffix products,
    so no EUP divide is issued; logs are only taken after the three lgammas of
    the Beta normalizer have been combined (see _postproc_kernel).
    """
    zm1 = z - 1.0
    fs = [zm1 + float(i) for i in range(1, 9)]        # f_i = z - 1 + i, i=1..8
    n = len(fs)
    prefix = [1.0] * n                                # prefix[k] = f_1..f_k
    for i in range(1, n):
        prefix[i] = prefix[i - 1] * fs[i - 1]
    suffix = [1.0] * n                                # suffix[k] = f_{k+2}..f_8
    for i in range(n - 2, -1, -1):
        suffix[i] = suffix[i + 1] * fs[i + 1]
    den = prefix[n - 1] * fs[n - 1]                   # f_1 * ... * f_8 (~ z^8)
    num = _LANCZOS_COEF[1] * suffix[0]
    for i in range(1, n):
        num = num + _LANCZOS_COEF[i + 1] * prefix[i] * suffix[i]
    P = _LANCZOS_COEF[0] * den + num                  # P / den = Lanczos series
    return P, den


# ---------------------------------------------------------------------------
# Batch (lane) tiling helper
# ---------------------------------------------------------------------------
def _tile_cols(B, cap):
    """Lane-tile size for the batch axis (batch is mapped to lanes).

    B < 256 : one whole-batch block (block lane dim == full array dim, so the
              (8,128) rule is satisfied without padding).
    B >= 256: multiple of 128, capped at `cap`, chosen so the grid has at
              least two steps (lets dimension_semantics=("parallel",) shard
              the batch across v7x's two TensorCores; costs only ~0.35us/step
              on single-TC v5e/v6e).  The trailing partial block relies on
              Pallas partial-block semantics: all per-column work here is
              column-independent, so garbage in out-of-range lanes never
              reaches a valid output (do NOT add cross-column reductions
              without revisiting this invariant).
    """
    if B < 256:
        return B
    tb = min(int(cap), pl.cdiv(pl.cdiv(B, 2), 128) * 128)
    return max(tb, 128)


# ---------------------------------------------------------------------------
# One-time parameter preparation (hoisted out of the per-call wrapper)
# ---------------------------------------------------------------------------
def prepare_actor(params, low, high):
    """Transpose weights to feature-major, fuse the alpha/beta heads and
    pre-transpose the action bounds.  Call once; reuse across forwards."""
    (w1, b1), (w2, b2), (w3, b3), (wa, ba), (wb, bb) = params
    wab = jnp.concatenate([wa, wb], axis=1)           # (H, 2A)
    bab = jnp.concatenate([ba, bb], axis=1)           # (1, 2A)
    weights = (w1.T, b1.T, w2.T, b2.T, w3.T, b3.T, wab.T, bab.T)
    low_t = jnp.asarray(low, jnp.float32).reshape(-1, 1)           # (A, 1)
    scale_t = (jnp.asarray(high, jnp.float32)
               - jnp.asarray(low, jnp.float32)).reshape(-1, 1)     # (A, 1)
    return weights, low_t, scale_t


# ---------------------------------------------------------------------------
# Kernel A: state^T -> (alpha | beta) as one (2A, tb) slab
# ---------------------------------------------------------------------------
def _heads_kernel(s_ref, w1_ref, b1_ref, w2_ref, b2_ref, w3_ref, b3_ref,
                  wab_ref, bab_ref, ab_ref):
    x = s_ref[...]                                                  # (S, tb)
    x = jnp.tanh(jnp.dot(w1_ref[...], x,
                         preferred_element_type=jnp.float32) + b1_ref[...])
    x = jnp.tanh(jnp.dot(w2_ref[...], x,
                         preferred_element_type=jnp.float32) + b2_ref[...])
    x = jnp.tanh(jnp.dot(w3_ref[...], x,
                         preferred_element_type=jnp.float32) + b3_ref[...])
    # fused alpha|beta head: one (2A,H)x(H,tb) matmul, one lane-dense slab out
    pre = jnp.dot(wab_ref[...], x,
                  preferred_element_type=jnp.float32) + bab_ref[...]
    ab_ref[...] = _softplus(pre) + 1.0                              # (2A, tb)


def compute_alpha_beta_t(state_t, weights, *, tb_cap=2048):
    """state_t: (S, B).  Returns ab_t (2A, B): rows [0:A)=alpha, [A:2A)=beta."""
    S, B = state_t.shape
    w1t, b1t, w2t, b2t, w3t, b3t, wabt, babt = weights
    H = w1t.shape[0]
    A2 = wabt.shape[0]

    tb = _tile_cols(B, tb_cap)
    grid = (pl.cdiv(B, tb),)

    def const_spec(shape):
        return pl.BlockSpec(shape, lambda i: (0,) * len(shape))

    ab_t = pl.pallas_call(
        _heads_kernel,
        out_shape=jax.ShapeDtypeStruct((A2, B), jnp.float32),
        grid=grid,
        in_specs=[
            pl.BlockSpec((S, tb), lambda i: (0, i)),
            const_spec((H, S)), const_spec((H, 1)),
            const_spec((H, H)), const_spec((H, 1)),
            const_spec((H, H)), const_spec((H, 1)),
            const_spec((A2, H)), const_spec((A2, 1)),
        ],
        out_specs=pl.BlockSpec((A2, tb), lambda i: (0, i)),
        compiler_params=pltpu.CompilerParams(dimension_semantics=("parallel",)),
    )(state_t, w1t, b1t, w2t, b2t, w3t, b3t, wabt, babt)
    return ab_t


# ---------------------------------------------------------------------------
# Kernel B: (alpha|beta, z, low, scale) -> (action^T, log_prob)
# ---------------------------------------------------------------------------
def _postproc_kernel(ab_ref, z_ref, low_ref, scale_ref, action_ref, logp_ref):
    ab = ab_ref[...]                      # (2A, tb): [0:A)=alpha, [A:2A)=beta
    A = ab.shape[0] // 2
    a, b = ab[:A, :], ab[A:, :]
    z = z_ref[...]                        # (A, tb)
    # Clip only inside the log terms so the returned action uses the raw sample.
    zc = jnp.clip(z, _EPS, 1.0 - _EPS)

    # Lanczos pieces: ONE dense (2A,tb) pass covers lgamma(alpha) and
    # lgamma(beta); a second (A,tb) pass covers lgamma(alpha+beta).
    P_s, den_s = _lanczos_parts(ab)
    t_s = ab + (_LANCZOS_G - 0.5)         # = z - 1 + g + 0.5
    s_ab = a + b
    P_c, den_c = _lanczos_parts(s_ab)
    t_c = s_ab + (_LANCZOS_G - 0.5)

    # Fused Beta normalizer (zero EUP divides):
    #   lgamma(a+b) - lgamma(a) - lgamma(b)
    #     = -0.5*log(2*pi) + (g - 0.5)
    #       + (a+b-0.5)*log(t_ab) - (a-0.5)*log(t_a) - (b-0.5)*log(t_b)
    #       + log(P_ab*den_a*den_b) - log(P_a*P_b*den_ab)
    # (-t_ab + t_a + t_b collapses to the constant g - 0.5; the _PROD_SCALE
    #  factors below cancel exactly between the two product logs).
    num_prod = ((P_c * _PROD_SCALE) * (den_s[:A] * _PROD_SCALE)
                * (den_s[A:] * _PROD_SCALE))
    den_prod = ((P_s[:A] * _PROD_SCALE) * (P_s[A:] * _PROD_SCALE)
                * (den_c * _PROD_SCALE))

    log_ts = jnp.log(t_s)                 # dense (2A, tb) EUP pass
    log_tc = jnp.log(t_c)
    log_np = jnp.log(num_prod)
    log_dp = jnp.log(den_prod)
    log_zc = jnp.log(zc)
    log_1mz = jnp.log(1.0 - zc)

    norm = (-0.5 * math.log(2.0 * math.pi) + (_LANCZOS_G - 0.5)
            + (s_ab - 0.5) * log_tc
            - (a - 0.5) * log_ts[:A] - (b - 0.5) * log_ts[A:]
            + log_np - log_dp)
    logp = (a - 1.0) * log_zc + (b - 1.0) * log_1mz + norm          # (A, tb)
    logp_ref[...] = jnp.sum(logp, axis=0, keepdims=True)            # (1, tb)
    action_ref[...] = z * scale_ref[...] + low_ref[...]             # (A, tb)


def scale_and_logprob_t(ab_t, z_t, low_t, scale_t, *, tb_cap=2048):
    """ab_t (2A,B), z_t (A,B), low_t/scale_t (A,1) -> action_t (A,B), logp (1,B)."""
    A2, B = ab_t.shape
    A = A2 // 2

    tb = _tile_cols(B, tb_cap)
    grid = (pl.cdiv(B, tb),)

    action_t, logp_t = pl.pallas_call(
        _postproc_kernel,
        out_shape=(jax.ShapeDtypeStruct((A, B), jnp.float32),
                   jax.ShapeDtypeStruct((1, B), jnp.float32)),
        grid=grid,
        in_specs=[pl.BlockSpec((A2, tb), lambda i: (0, i)),
                  pl.BlockSpec((A, tb), lambda i: (0, i)),
                  pl.BlockSpec((A, 1), lambda i: (0, 0)),
                  pl.BlockSpec((A, 1), lambda i: (0, 0))],
        out_specs=(pl.BlockSpec((A, tb), lambda i: (0, i)),
                   pl.BlockSpec((1, tb), lambda i: (0, i))),
        compiler_params=pltpu.CompilerParams(dimension_semantics=("parallel",)),
    )(ab_t, z_t, low_t, scale_t)
    return action_t, logp_t


# ---------------------------------------------------------------------------
# Full forward
# ---------------------------------------------------------------------------
def beta_actor_forward(state, prepared, sample_key, *, tb_cap=2048):
    """state: (B, S) row-major.  Returns (action (B, A), log_prob (B, 1))."""
    weights, low_t, scale_t = prepared
    state_t = state.T                                   # tiny (S, B) transpose
    ab_t = compute_alpha_beta_t(state_t, weights, tb_cap=tb_cap)
    A = ab_t.shape[0] // 2
    # TODO(synk): torch.distributions.Beta.rsample (gamma rejection sampling)
    # has no clean Pallas equivalent; the sample is drawn in plain JAX here.
    z_t = jax.random.beta(sample_key, ab_t[:A], ab_t[A:]).astype(jnp.float32)
    action_t, logp_t = scale_and_logprob_t(ab_t, z_t, low_t, scale_t,
                                           tb_cap=tb_cap)
    return action_t.T, logp_t.T


# ---------------------------------------------------------------------------
# Deterministic parameter init (PyTorch-style U(-1/sqrt(fan_in), 1/sqrt(fan_in)))
# ---------------------------------------------------------------------------
def init_linear(key, fan_in, fan_out):
    kw, kb = jax.random.split(key)
    bound = 1.0 / math.sqrt(fan_in)
    w = jax.random.uniform(kw, (fan_in, fan_out), jnp.float32, -bound, bound)
    b = jax.random.uniform(kb, (1, fan_out), jnp.float32, -bound, bound)
    return w, b


def _ref_alpha_beta(state, params):
    (w1, b1), (w2, b2), (w3, b3), (wa, ba), (wb, bb) = params
    x = jnp.tanh(state @ w1 + b1)
    x = jnp.tanh(x @ w2 + b2)
    x = jnp.tanh(x @ w3 + b3)
    alpha = jax.nn.softplus(x @ wa + ba) + 1.0
    beta = jax.nn.softplus(x @ wb + bb) + 1.0
    return alpha, beta


if __name__ == "__main__":
    B, STATE_DIM, HIDDEN_DIM, ACTION_DIM = 16, 16, 32, 4

    root = jax.random.PRNGKey(0)
    k1, k2, k3, k4, k5, kstate, ksample = jax.random.split(root, 7)

    params = (
        init_linear(k1, STATE_DIM, HIDDEN_DIM),   # affine[0]
        init_linear(k2, HIDDEN_DIM, HIDDEN_DIM),  # affine[2]
        init_linear(k3, HIDDEN_DIM, HIDDEN_DIM),  # affine[4]
        init_linear(k4, HIDDEN_DIM, ACTION_DIM),  # alpha_pre_softplus
        init_linear(k5, HIDDEN_DIM, ACTION_DIM),  # beta_pre_softplus
    )

    # action_boundaries: row 0 = low, row 1 = high
    action_space_low = jnp.array([[-1.0, -2.0, -0.5, 0.0]], dtype=jnp.float32)
    action_space_high = jnp.array([[1.0, 2.0, 0.5, 3.0]], dtype=jnp.float32)

    prepared = prepare_actor(params, action_space_low, action_space_high)

    state = jax.random.normal(kstate, (B, STATE_DIM), dtype=jnp.float32)

    # ---- end-to-end forward (single whole-batch block) ----------------------
    action, log_prob = beta_actor_forward(state, prepared, ksample)
    jax.block_until_ready((action, log_prob))
    assert action.shape == (B, ACTION_DIM) and log_prob.shape == (B, 1)
    assert bool(jnp.all(jnp.isfinite(action))) and bool(jnp.all(jnp.isfinite(log_prob)))

    # ---- numeric check against a plain-JAX reference ------------------------
    ab_t = compute_alpha_beta_t(state.T, prepared[0])
    alpha_k, beta_k = ab_t[:ACTION_DIM].T, ab_t[ACTION_DIM:].T
    alpha_r, beta_r = _ref_alpha_beta(state, params)
    assert bool(jnp.allclose(alpha_k, alpha_r, atol=1e-4, rtol=1e-4))
    assert bool(jnp.allclose(beta_k, beta_r, atol=1e-4, rtol=1e-4))

    z_t = jax.random.beta(ksample, ab_t[:ACTION_DIM],
                          ab_t[ACTION_DIM:]).astype(jnp.float32)
    act_t, lp_t = scale_and_logprob_t(ab_t, z_t, prepared[1], prepared[2])
    z = z_t.T
    zc = jnp.clip(z, _EPS, 1.0 - _EPS)
    lp_r = jnp.sum((alpha_k - 1.0) * jnp.log(zc)
                   + (beta_k - 1.0) * jnp.log(1.0 - zc)
                   + jax.lax.lgamma(alpha_k + beta_k)
                   - jax.lax.lgamma(alpha_k) - jax.lax.lgamma(beta_k),
                   axis=-1, keepdims=True)
    act_r = z * (action_space_high - action_space_low) + action_space_low
    assert bool(jnp.allclose(act_t.T, act_r, atol=1e-6, rtol=1e-6))
    assert bool(jnp.allclose(lp_t.T, lp_r, atol=2e-3, rtol=2e-3))

    # ---- tiled path: multi-block grid with a trailing partial block ---------
    B2 = 300   # tb=128 -> grid=(3,), last block has only 44 valid lanes
    state2 = jax.random.normal(jax.random.PRNGKey(1), (B2, STATE_DIM), jnp.float32)
    action2, log_prob2 = beta_actor_forward(state2, prepared,
                                            jax.random.PRNGKey(2), tb_cap=128)
    jax.block_until_ready((action2, log_prob2))
    assert action2.shape == (B2, ACTION_DIM) and log_prob2.shape == (B2, 1)
    assert bool(jnp.all(jnp.isfinite(action2))) and bool(jnp.all(jnp.isfinite(log_prob2)))

    ab2_t = compute_alpha_beta_t(state2.T, prepared[0], tb_cap=128)
    alpha2_r, beta2_r = _ref_alpha_beta(state2, params)
    assert bool(jnp.allclose(ab2_t[:ACTION_DIM].T, alpha2_r, atol=1e-4, rtol=1e-4))
    assert bool(jnp.allclose(ab2_t[ACTION_DIM:].T, beta2_r, atol=1e-4, rtol=1e-4))

    print("KERNEL_OK")
</pallas_src>

<mosaic_0001>
module attributes {stable_mosaic.version = 11 : i64} {
  func.func @_heads_kernel(%arg0: i32, %arg1: memref<16x16xf32, #tpu.memory_space<vmem>>, %arg2: memref<32x16xf32, #tpu.memory_space<vmem>>, %arg3: memref<32x1xf32, #tpu.memory_space<vmem>>, %arg4: memref<32x32xf32, #tpu.memory_space<vmem>>, %arg5: memref<32x1xf32, #tpu.memory_space<vmem>>, %arg6: memref<32x32xf32, #tpu.memory_space<vmem>>, %arg7: memref<32x1xf32, #tpu.memory_space<vmem>>, %arg8: memref<8x32xf32, #tpu.memory_space<vmem>>, %arg9: memref<8x1xf32, #tpu.memory_space<vmem>>, %arg10: memref<8x16xf32, #tpu.memory_space<vmem>>) attributes {dimension_semantics = [#tpu.dimension_semantics<parallel>], iteration_bounds = array<i64: 1>, scalar_prefetch = 0 : i64, scratch_operands = 0 : i64, tpu.core_type = #tpu.core_type<tc>, window_params = [{transform_indices = @transform_0, window_bounds = array<i64: 16, 16>}, {pipeline_mode = #tpu.pipeline_mode<synchronous>, transform_indices = @transform_1, window_bounds = array<i64: 32, 16>}, {pipeline_mode = #tpu.pipeline_mode<synchronous>, transform_indices = @transform_2, window_bounds = array<i64: 32, 1>}, {pipeline_mode = #tpu.pipeline_mode<synchronous>, transform_indices = @transform_3, window_bounds = array<i64: 32, 32>}, {pipeline_mode = #tpu.pipeline_mode<synchronous>, transform_indices = @transform_4, window_bounds = array<i64: 32, 1>}, {pipeline_mode = #tpu.pipeline_mode<synchronous>, transform_indices = @transform_5, window_bounds = array<i64: 32, 32>}, {pipeline_mode = #tpu.pipeline_mode<synchronous>, transform_indices = @transform_6, window_bounds = array<i64: 32, 1>}, {pipeline_mode = #tpu.pipeline_mode<synchronous>, transform_indices = @transform_7, window_bounds = array<i64: 8, 32>}, {pipeline_mode = #tpu.pipeline_mode<synchronous>, transform_indices = @transform_8, window_bounds = array<i64: 8, 1>}, {transform_indices = @transform_9, window_bounds = array<i64: 8, 16>}]} {
    %c0 = arith.constant 0 : index
    %c0_0 = arith.constant 0 : index
    %0 = vector.load %arg1[%c0, %c0_0] : memref<16x16xf32, #tpu.memory_space<vmem>>, vector<16x16xf32>
    %c0_1 = arith.constant 0 : index
    %c0_2 = arith.constant 0 : index
    %1 = vector.load %arg2[%c0_1, %c0_2] : memref<32x16xf32, #tpu.memory_space<vmem>>, vector<32x16xf32>
    %cst = arith.constant dense<0.000000e+00> : vector<32x16xf32>
    %2 = tpu.matmul %1, %0, %cst {dimension_numbers = #tpu.dot_dimension_numbers<[1], [0], [0], [1], [0, 0, 1, 1], [], []>} : vector<32x16xf32>, vector<16x16xf32>, vector<32x16xf32> -> vector<32x16xf32>
    %c0_3 = arith.constant 0 : index
    %c0_4 = arith.constant 0 : index
    %3 = vector.load %arg3[%c0_3, %c0_4] : memref<32x1xf32, #tpu.memory_space<vmem>>, vector<32x1xf32>
    %4 = vector.broadcast %3 : vector<32x1xf32> to vector<32x16xf32>
    %5 = arith.addf %2, %4 : vector<32x16xf32>
    %6 = math.tanh %5 : vector<32x16xf32>
    %c0_5 = arith.constant 0 : index
    %c0_6 = arith.constant 0 : index
    %7 = vector.load %arg4[%c0_5, %c0_6] : memref<32x32xf32, #tpu.memory_space<vmem>>, vector<32x32xf32>
    %cst_7 = arith.constant dense<0.000000e+00> : vector<32x16xf32>
    %8 = tpu.matmul %7, %6, %cst_7 {dimension_numbers = #tpu.dot_dimension_numbers<[1], [0], [0], [1], [0, 0, 1, 1], [], []>} : vector<32x32xf32>, vector<32x16xf32>, vector<32x16xf32> -> vector<32x16xf32>
    %c0_8 = arith.constant 0 : index
    %c0_9 = arith.constant 0 : index
    %9 = vector.load %arg5[%c0_8, %c0_9] : memref<32x1xf32, #tpu.memory_space<vmem>>, vector<32x1xf32>
    %10 = vector.broadcast %9 : vector<32x1xf32> to vector<32x16xf32>
    %11 = arith.addf %8, %10 : vector<32x16xf32>
    %12 = math.tanh %11 : vector<32x16xf32>
    %c0_10 = arith.constant 0 : index
    %c0_11 = arith.constant 0 : index
    %13 = vector.load %arg6[%c0_10, %c0_11] : memref<32x32xf32, #tpu.memory_space<vmem>>, vector<32x32xf32>
    %cst_12 = arith.constant dense<0.000000e+00> : vector<32x16xf32>
    %14 = tpu.matmul %13, %12, %cst_12 {dimension_numbers = #tpu.dot_dimension_numbers<[1], [0], [0], [1], [0, 0, 1, 1], [], []>} : vector<32x32xf32>, vector<32x16xf32>, vector<32x16xf32> -> vector<32x16xf32>
    %c0_13 = arith.constant 0 : index
    %c0_14 = arith.constant 0 : index
    %15 = vector.load %arg7[%c0_13, %c0_14] : memref<32x1xf32, #tpu.memory_space<vmem>>, vector<32x1xf32>
    %16 = vector.broadcast %15 : vector<32x1xf32> to vector<32x16xf32>
    %17 = arith.addf %14, %16 : vector<32x16xf32>
    %18 = math.tanh %17 : vector<32x16xf32>
    %c0_15 = arith.constant 0 : index
    %c0_16 = arith.constant 0 : index
    %19 = vector.load %arg8[%c0_15, %c0_16] : memref<8x32xf32, #tpu.memory_space<vmem>>, vector<8x32xf32>
    %cst_17 = arith.constant dense<0.000000e+00> : vector<8x16xf32>
    %20 = tpu.matmul %19, %18, %cst_17 {dimension_numbers = #tpu.dot_dimension_numbers<[1], [0], [0], [1], [0, 0, 1, 1], [], []>} : vector<8x32xf32>, vector<32x16xf32>, vector<8x16xf32> -> vector<8x16xf32>
    %c0_18 = arith.constant 0 : index
    %c0_19 = arith.constant 0 : index
    %21 = vector.load %arg9[%c0_18, %c0_19] : memref<8x1xf32, #tpu.memory_space<vmem>>, vector<8x1xf32>
    %22 = vector.broadcast %21 : vector<8x1xf32> to vector<8x16xf32>
    %23 = arith.addf %20, %22 : vector<8x16xf32>
    %cst_20 = arith.constant 0.000000e+00 : f32
    %24 = vector.broadcast %cst_20 : f32 to vector<8x16xf32>
    %25 = arith.maximumf %23, %24 : vector<8x16xf32>
    %26 = math.absf %23 : vector<8x16xf32>
    %cst_21 = arith.constant 0.000000e+00 : f32
    %27 = vector.broadcast %cst_21 : f32 to vector<8x16xf32>
    %28 = arith.subf %27, %26 : vector<8x16xf32>
    %29 = math.exp %28 : vector<8x16xf32>
    %cst_22 = arith.constant 1.000000e+00 : f32
    %30 = vector.broadcast %cst_22 : f32 to vector<8x16xf32>
    %31 = arith.addf %30, %29 : vector<8x16xf32>
    %32 = math.log %31 : vector<8x16xf32>
    %33 = arith.addf %25, %32 : vector<8x16xf32>
    %cst_23 = arith.constant 1.000000e+00 : f32
    %34 = vector.broadcast %cst_23 : f32 to vector<8x16xf32>
    %35 = arith.addf %33, %34 : vector<8x16xf32>
    %c0_24 = arith.constant 0 : index
    %c0_25 = arith.constant 0 : index
    %36 = vector.load %arg10[%c0_24, %c0_25] : memref<8x16xf32, #tpu.memory_space<vmem>>, vector<8x16xf32>
    tpu.vector_store %arg10[%c0_24, %c0_25], %35 {strides = array<i32>} : memref<8x16xf32, #tpu.memory_space<vmem>>, vector<8x16xf32>,
    return
  }
  func.func @transform_0(%arg0: i32) -> (i32, i32) {
    %c0_i32 = arith.constant 0 : i32
    %c0_i32_0 = arith.constant 0 : i32
    return %c0_i32, %arg0 : i32, i32
  }
  func.func @transform_1(%arg0: i32) -> (i32, i32) {
    %c0_i32 = arith.constant 0 : i32
    %c0_i32_0 = arith.constant 0 : i32
    %c0_i32_1 = arith.constant 0 : i32
    return %c0_i32, %c0_i32_0 : i32, i32
  }
  func.func @transform_2(%arg0: i32) -> (i32, i32) {
    %c0_i32 = arith.constant 0 : i32
    %c0_i32_0 = arith.constant 0 : i32
    %c0_i32_1 = arith.constant 0 : i32
    return %c0_i32, %c0_i32_0 : i32, i32
  }
  func.func @transform_3(%arg0: i32) -> (i32, i32) {
    %c0_i32 = arith.constant 0 : i32
    %c0_i32_0 = arith.constant 0 : i32
    %c0_i32_1 = arith.constant 0 : i32
    return %c0_i32, %c0_i32_0 : i32, i32
  }
  func.func @transform_4(%arg0: i32) -> (i32, i32) {
    %c0_i32 = arith.constant 0 : i32
    %c0_i32_0 = arith.constant 0 : i32
    %c0_i32_1 = arith.constant 0 : i32
    return %c0_i32, %c0_i32_0 : i32, i32
  }
  func.func @transform_5(%arg0: i32) -> (i32, i32) {
    %c0_i32 = arith.constant 0 : i32
    %c0_i32_0 = arith.constant 0 : i32
    %c0_i32_1 = arith.constant 0 : i32
    return %c0_i32, %c0_i32_0 : i32, i32
  }
  func.func @transform_6(%arg0: i32) -> (i32, i32) {
    %c0_i32 = arith.constant 0 : i32
    %c0_i32_0 = arith.constant 0 : i32
    %c0_i32_1 = arith.constant 0 : i32
    return %c0_i32, %c0_i32_0 : i32, i32
  }
  func.func @transform_7(%arg0: i32) -> (i32, i32) {
    %c0_i32 = arith.constant 0 : i32
    %c0_i32_0 = arith.constant 0 : i32
    %c0_i32_1 = arith.constant 0 : i32
    return %c0_i32, %c0_i32_0 : i32, i32
  }
  func.func @transform_8(%arg0: i32) -> (i32, i32) {
    %c0_i32 = arith.constant 0 : i32
    %c0_i32_0 = arith.constant 0 : i32
    %c0_i32_1 = arith.constant 0 : i32
    return %c0_i32, %c0_i32_0 : i32, i32
  }
  func.func @transform_9(%arg0: i32) -> (i32, i32) {
    %c0_i32 = arith.constant 0 : i32
    %c0_i32_0 = arith.constant 0 : i32
    return %c0_i32, %arg0 : i32, i32
  }
}

</mosaic_0001>

<llo_original>
// kernel: tpu_custom_call.1
$region0: #{tpu_custom_call.1}
  #allocation0 [shape = 'u32[]', space=smem, size = 0x4, offset = 0x4, fixed_abs, tag = 'smem constant byte address 0x4 - core index']
  #allocation1 [shape = 'u32[144,128]{1,0:T(1,128)}', space=vmem, size = 0x12000, scoped, tag = 'internal scratch']
  %s0 = inlined_call_operand.vmem [shape: f32[16,16], index: 0, kind: input, shape index: {}]
  %s1 = inlined_call_operand.vmem [shape: f32[32,16], index: 1, kind: input, shape index: {}]
  %s2 = inlined_call_operand.vmem [shape: f32[32,1], index: 2, kind: input, shape index: {}]
  %s3 = inlined_call_operand.vmem [shape: f32[32,32], index: 3, kind: input, shape index: {}]
  %s4 = inlined_call_operand.vmem [shape: f32[32,1], index: 4, kind: input, shape index: {}]
  %s5 = inlined_call_operand.vmem [shape: f32[32,32], index: 5, kind: input, shape index: {}]
  %s6 = inlined_call_operand.vmem [shape: f32[32,1], index: 6, kind: input, shape index: {}]
  %s7 = inlined_call_operand.vmem [shape: f32[8,32], index: 7, kind: input, shape index: {}]
  %s8 = inlined_call_operand.vmem [shape: f32[8,1], index: 8, kind: input, shape index: {}]
  %s9 = inlined_call_operand.hbm [shape: f32[8,16], index: 9, kind: output, shape index: {}]
  %s10 = sld [smem:[#allocation0]]
  $region46: #{tpu_custom_call.1} parent=0
    _
  %s12 = ssub.s32 1, %s10
  %s13 = scalar_select 0, %s12, %s10
  $region1: #{tpu_custom_call.1} parent=0
    #allocation2 [shape = 'u8[4096]{0}', space=vmem, size = 0x1000, scoped, tag = 'output window, operand 0, single buffered']
    #allocation3 [shape = 's32[1]{0}', space=sflag, size = 0x4, scoped, tag = 'scoped memory for tpu_custom_call.1']
    %14 = vsyncpa [#allocation3], 0
    // Predicated region
    $region2: #{tpu_custom_call.1} parent=1 // pred_check
      _
    $region3: #{tpu_custom_call.1} parent=1 // pred_check_branch
      %16 = sbr.rel (0) target = $region5
    $region4: #{tpu_custom_call.1} parent=1 // pred_region
      _
    $region5: #{tpu_custom_call.1} parent=1 // pred_fallthru
      _
    // Predicated region
    $region6: #{tpu_custom_call.1} parent=1 // pred_check
      _
    $region7: #{tpu_custom_call.1} parent=1 // pred_check_branch
      %18 = sbr.rel (0) target = $region9
    $region8: #{tpu_custom_call.1} parent=1 // pred_region
      _
    $region9: #{tpu_custom_call.1} parent=1 // pred_fallthru
      _
    // Predicated region
    $region10: #{tpu_custom_call.1} parent=1 // pred_check
      _
    $region11: #{tpu_custom_call.1} parent=1 // pred_check_branch
      %20 = sbr.rel (0) target = $region13
    $region12: #{tpu_custom_call.1} parent=1 // pred_region
      _
    $region13: #{tpu_custom_call.1} parent=1 // pred_fallthru
      _
    // Predicated region
    $region14: #{tpu_custom_call.1} parent=1 // pred_check
      _
    $region15: #{tpu_custom_call.1} parent=1 // pred_check_branch
      %22 = sbr.rel (0) target = $region17
    $region16: #{tpu_custom_call.1} parent=1 // pred_region
      _
    $region17: #{tpu_custom_call.1} parent=1 // pred_fallthru
      _
    // Predicated region
    $region18: #{tpu_custom_call.1} parent=1 // pred_check
      _
    $region19: #{tpu_custom_call.1} parent=1 // pred_check_branch
      %24 = sbr.rel (0) target = $region21
    $region20: #{tpu_custom_call.1} parent=1 // pred_region
      _
    $region21: #{tpu_custom_call.1} parent=1 // pred_fallthru
      _
    // Predicated region
    $region22: #{tpu_custom_call.1} parent=1 // pred_check
      _
    $region23: #{tpu_custom_call.1} parent=1 // pred_check_branch
      %26 = sbr.rel (0) target = $region25
    $region24: #{tpu_custom_call.1} parent=1 // pred_region
      _
    $region25: #{tpu_custom_call.1} parent=1 // pred_fallthru
      _
    // Predicated region
    $region26: #{tpu_custom_call.1} parent=1 // pred_check
      _
    $region27: #{tpu_custom_call.1} parent=1 // pred_check_branch
      %28 = sbr.rel (0) target = $region29
    $region28: #{tpu_custom_call.1} parent=1 // pred_region
      _
    $region29: #{tpu_custom_call.1} parent=1 // pred_fallthru
      _
    // Predicated region
    $region30: #{tpu_custom_call.1} parent=1 // pred_check
      _
    $region31: #{tpu_custom_call.1} parent=1 // pred_check_branch
      %30 = sbr.rel (0) target = $region33
    $region32: #{tpu_custom_call.1} parent=1 // pred_region
      _
    $region33: #{tpu_custom_call.1} parent=1 // pred_fallthru
      _
    // Predicated region
    $region34: #{tpu_custom_call.1} parent=1 // pred_check
      _
    $region35: #{tpu_custom_call.1} parent=1 // pred_check_branch
      %32 = sbr.rel (0) target = $region37
    $region36: #{tpu_custom_call.1} parent=1 // pred_region
      _
    $region37: #{tpu_custom_call.1} parent=1 // pred_fallthru
      _
    %v33 = vld [vmem:[%s0] sm:$0xff]
    %v34 = vld [vmem:[%s0 + $0x8] sm:$0xff]
    %v35 = vld [vmem:[%s1] sm:$0xff]
    %v36 = vld [vmem:[%s1 + $0x8] sm:$0xff]
    %v37 = vld [vmem:[%s1 + $0x10] sm:$0xff]
    %v38 = vld [vmem:[%s1 + $0x18] sm:$0xff]
    %v39 = vld [vmem:[%s2] sm:$0xff]
    %v40 = vld [vmem:[%s2 + $0x8] sm:$0xff]
    %v41 = vld [vmem:[%s2 + $0x10] sm:$0xff]
    %v42 = vld [vmem:[%s2 + $0x18] sm:$0xff]
    %44 = vset.pattern.permute.xlu0 0
    %45 = vperm.xlu0 %44, %v39
    %v46 = vpop.permute.xlu0 %45
    %49 = vset.pattern.permute.xlu0 0
    %50 = vperm.xlu0 %49, %v40
    %v51 = vpop.permute.xlu0 %50
    %54 = vset.pattern.permute.xlu0 0
    %55 = vperm.xlu0 %54, %v41
    %v56 = vpop.permute.xlu0 %55
    %59 = vset.pattern.permute.xlu0 0
    %60 = vperm.xlu0 %59, %v42
    %v61 = vpop.permute.xlu0 %60
    %vm63 = vcmask 130048
    %v65 = vsel %vm63, %v35, 0
    %v68 = vsel %vm63, %v36, 0
    %v71 = vsel %vm63, %v37, 0
    %v74 = vsel %vm63, %v38, 0
    %76 = vmatprep.subr.mxu0 0.0
    %77 = vmatpush1.msra.mxu0 0.0
    %78 = vmatprep.subr.mxu0 0.0
    %79 = vmatpush1.msra.mxu0 0.0
    %80 = vmatprep.subr.mxu0 0.0
    %81 = vmatpush1.msra.mxu0 0.0
    %82 = vmatprep.subr.mxu0 0.0
    %83 = vmatpush1.msra.mxu0 0.0
    %84 = vmatprep.subr.mxu0 0.0
    %85 = vmatpush1.msra.mxu0 0.0
    %86 = vmatprep.subr.mxu0 0.0
    %87 = vmatpush1.msra.mxu0 0.0
    %88 = vmatprep.subr.mxu0 0.0
    %89 = vmatpush1.msra.mxu0 0.0
    %90 = vmatprep.subr.mxu0 0.0
    %91 = vmatpush1.msra.mxu0 0.0
    %92 = vmatprep.subr.mxu0 0.0
    %93 = vmatpush1.msra.mxu0 0.0
    %94 = vmatprep.subr.mxu0 0.0
    %95 = vmatpush1.msra.mxu0 0.0
    %96 = vmatprep.subr.mxu0 0.0
    %97 = vmatpush1.msra.mxu0 0.0
    %98 = vmatprep.subr.mxu0 0.0
    %99 = vmatpush1.msra.mxu0 0.0
    %100 = vmatprep.subr.mxu0 0.0
    %101 = vmatpush1.msra.mxu0 0.0
    %102 = vmatprep.subr.mxu0 0.0
    %103 = vmatpush1.msra.mxu0 0.0
    %104 = vmatprep.subr.mxu0 0.0
    %105 = vmatpush1.msra.mxu0 %v34
    %106 = vmatprep.subr.mxu0 0.0
    %107 = vmatpush1.msra.mxu0 %v33
    %108 = vmatprep.subr.mxu0 0.0
    %109 = vmatpush2.msra.mxu0 0.0
    %110 = vmatprep.subr.mxu0 0.0
    %111 = vmatpush2.msra.mxu0 0.0
    %112 = vmatprep.subr.mxu0 0.0
    %113 = vmatpush2.msra.mxu0 0.0
    %114 = vmatprep.subr.mxu0 0.0
    %115 = vmatpush2.msra.mxu0 0.0
    %116 = vmatprep.subr.mxu0 0.0
    %117 = vmatpush2.msra.mxu0 0.0
    %118 = vmatprep.subr.mxu0 0.0
    %119 = vmatpush2.msra.mxu0 0.0
    %120 = vmatprep.subr.mxu0 0.0
    %121 = vmatpush2.msra.mxu0 0.0
    %122 = vmatprep.subr.mxu0 0.0
    %123 = vmatpush2.msra.mxu0 0.0
    %124 = vmatprep.subr.mxu0 0.0
    %125 = vmatpush2.msra.mxu0 0.0
    %126 = vmatprep.subr.mxu0 0.0
    %127 = vmatpush2.msra.mxu0 0.0
    %128 = vmatprep.subr.mxu0 0.0
    %129 = vmatpush2.msra.mxu0 0.0
    %130 = vmatprep.subr.mxu0 0.0
    %131 = vmatpush2.msra.mxu0 0.0
    %132 = vmatprep.subr.mxu0 0.0
    %133 = vmatpush2.msra.mxu0 0.0
    %134 = vmatprep.subr.mxu0 0.0
    %135 = vmatpush2.msra.mxu0 0.0
    %136 = vmatprep.subr.mxu0 0.0
    %137 = vmatpush2.msra.mxu0 0.0
    %138 = vmatprep.subr.mxu0 0.0
    %139 = vmatpush2.msra.mxu0 0.0
    %140 = vmatprep.mubr.f32.mxu0 0.0
    %141 = vmatmul.mubr.f32.gmra.mxu0 %v65
    %v142 = vpop.f32.mrf.mxu0
    %v143 = vadd.f32 %v46, %v142
    %v144 = vpop.f32.mrf.mxu0
    %145 = vmatprep.mubr.f32.mxu0 0.0
    %146 = vmatmul.mubr.f32.gmra.mxu0 %v68
    %v147 = vpop.f32.mrf.mxu0
    %v148 = vadd.f32 %v51, %v147
    %v149 = vpop.f32.mrf.mxu0
    %150 = vmatprep.mubr.f32.mxu0 0.0
    %151 = vmatmul.mubr.f32.gmra.mxu0 %v71
    %v152 = vpop.f32.mrf.mxu0
    %v153 = vadd.f32 %v56, %v152
    %v154 = vpop.f32.mrf.mxu0
    %155 = vmatprep.mubr.f32.mxu0 0.0
    %156 = vmatmul.mubr.f32.gmra.mxu0 %v74
    %v157 = vpop.f32.mrf.mxu0
    %v158 = vadd.f32 %v61, %v157
    %v159 = vpop.f32.mrf.mxu0
    %160 = vdwg.mxu0
    %v161 = vtanh.pop %v143
    %v162 = vtanh.pop %v148
    %v163 = vtanh.pop %v153
    %v164 = vtanh.pop %v158
    %v165 = vld [vmem:[%s3] sm:$0xff]
    %v166 = vld [vmem:[%s3 + $0x8] sm:$0xff]
    %v167 = vld [vmem:[%s3 + $0x10] sm:$0xff]
    %v168 = vld [vmem:[%s3 + $0x18] sm:$0xff]
    %v169 = vld [vmem:[%s4] sm:$0xff]
    %v170 = vld [vmem:[%s4 + $0x8] sm:$0xff]
    %v171 = vld [vmem:[%s4 + $0x10] sm:$0xff]
    %v172 = vld [vmem:[%s4 + $0x18] sm:$0xff]
    %174 = vset.pattern.permute.xlu0 0
    %175 = vperm.xlu0 %174, %v169
    %v176 = vpop.permute.xlu0 %175
    %179 = vset.pattern.permute.xlu0 0
    %180 = vperm.xlu0 %179, %v170
    %v181 = vpop.permute.xlu0 %180
    %184 = vset.pattern.permute.xlu0 0
    %185 = vperm.xlu0 %184, %v171
    %v186 = vpop.permute.xlu0 %185
    %189 = vset.pattern.permute.xlu0 0
    %190 = vperm.xlu0 %189, %v172
    %v191 = vpop.permute.xlu0 %190
    %vm193 = vcmask 261120
    %v195 = vsel %vm193, %v165, 0
    %v198 = vsel %vm193, %v166, 0
    %v201 = vsel %vm193, %v167, 0
    %v204 = vsel %vm193, %v168, 0
    %206 = vmatprep.subr.mxu0 0.0
    %207 = vmatpush1.msra.mxu0 0.0
    %208 = vmatprep.subr.mxu0 0.0
    %209 = vmatpush1.msra.mxu0 0.0
    %210 = vmatprep.subr.mxu0 0.0
    %211 = vmatpush1.msra.mxu0 0.0
    %212 = vmatprep.subr.mxu0 0.0
    %213 = vmatpush1.msra.mxu0 0.0
    %214 = vmatprep.subr.mxu0 0.0
    %215 = vmatpush1.msra.mxu0 0.0
    %216 = vmatprep.subr.mxu0 0.0
    %217 = vmatpush1.msra.mxu0 0.0
    %218 = vmatprep.subr.mxu0 0.0
    %219 = vmatpush1.msra.mxu0 0.0
    %220 = vmatprep.subr.mxu0 0.0
    %221 = vmatpush1.msra.mxu0 0.0
    %222 = vmatprep.subr.mxu0 0.0
    %223 = vmatpush1.msra.mxu0 0.0
    %224 = vmatprep.subr.mxu0 0.0
    %225 = vmatpush1.msra.mxu0 0.0
    %226 = vmatprep.subr.mxu0 0.0
    %227 = vmatpush1.msra.mxu0 0.0
    %228 = vmatprep.subr.mxu0 0.0
    %229 = vmatpush1.msra.mxu0 0.0
    %230 = vmatprep.subr.mxu0 0.0
    %231 = vmatpush1.msra.mxu0 %v164
    %232 = vmatprep.subr.mxu0 0.0
    %233 = vmatpush1.msra.mxu0 %v163
    %234 = vmatprep.subr.mxu0 0.0
    %235 = vmatpush1.msra.mxu0 %v162
    %236 = vmatprep.subr.mxu0 0.0
    %237 = vmatpush1.msra.mxu0 %v161
    %238 = vmatprep.subr.mxu0 0.0
    %239 = vmatpush2.msra.mxu0 0.0
    %240 = vmatprep.subr.mxu0 0.0
    %241 = vmatpush2.msra.mxu0 0.0
    %242 = vmatprep.subr.mxu0 0.0
    %243 = vmatpush2.msra.mxu0 0.0
    %244 = vmatprep.subr.mxu0 0.0
    %245 = vmatpush2.msra.mxu0 0.0
    %246 = vmatprep.subr.mxu0 0.0
    %247 = vmatpush2.msra.mxu0 0.0
    %248 = vmatprep.subr.mxu0 0.0
    %249 = vmatpush2.msra.mxu0 0.0
    %250 = vmatprep.subr.mxu0 0.0
    %251 = vmatpush2.msra.mxu0 0.0
    %252 = vmatprep.subr.mxu0 0.0
    %253 = vmatpush2.msra.mxu0 0.0
    %254 = vmatprep.subr.mxu0 0.0
    %255 = vmatpush2.msra.mxu0 0.0
    %256 = vmatprep.subr.mxu0 0.0
    %257 = vmatpush2.msra.mxu0 0.0
    %258 = vmatprep.subr.mxu0 0.0
    %259 = vmatpush2.msra.mxu0 0.0
    %260 = vmatprep.subr.mxu0 0.0
    %261 = vmatpush2.msra.mxu0 0.0
    %262 = vmatprep.subr.mxu0 0.0
    %263 = vmatpush2.msra.mxu0 0.0
    %264 = vmatprep.subr.mxu0 0.0
    %265 = vmatpush2.msra.mxu0 0.0
    %266 = vmatprep.subr.mxu0 0.0
    %267 = vmatpush2.msra.mxu0 0.0
    %268 = vmatprep.subr.mxu0 0.0
    %269 = vmatpush2.msra.mxu0 0.0
    %270 = vmatprep.mubr.f32.mxu0 0.0
    %271 = vmatmul.mubr.f32.gmra.mxu0 %v195
    %v272 = vpop.f32.mrf.mxu0
    %v273 = vadd.f32 %v176, %v272
    %v274 = vpop.f32.mrf.mxu0
    %275 = vmatprep.mubr.f32.mxu0 0.0
    %276 = vmatmul.mubr.f32.gmra.mxu0 %v198
    %v277 = vpop.f32.mrf.mxu0
    %v278 = vadd.f32 %v181, %v277
    %v279 = vpop.f32.mrf.mxu0
    %280 = vmatprep.mubr.f32.mxu0 0.0
    %281 = vmatmul.mubr.f32.gmra.mxu0 %v201
    %v282 = vpop.f32.mrf.mxu0
    %v283 = vadd.f32 %v186, %v282
    %v284 = vpop.f32.mrf.mxu0
    %285 = vmatprep.mubr.f32.mxu0 0.0
    %286 = vmatmul.mubr.f32.gmra.mxu0 %v204
    %v287 = vpop.f32.mrf.mxu0
    %v288 = vadd.f32 %v191, %v287
    %v289 = vpop.f32.mrf.mxu0
    %290 = vdwg.mxu0
    %v291 = vtanh.pop %v273
    %v292 = vtanh.pop %v278
    %v293 = vtanh.pop %v283
    %v294 = vtanh.pop %v288
    %v295 = vld [vmem:[%s5] sm:$0xff]
    %v296 = vld [vmem:[%s5 + $0x8] sm:$0xff]
    %v297 = vld [vmem:[%s5 + $0x10] sm:$0xff]
    %v298 = vld [vmem:[%s5 + $0x18] sm:$0xff]
    %v299 = vld [vmem:[%s6] sm:$0xff]
    %v300 = vld [vmem:[%s6 + $0x8] sm:$0xff]
    %v301 = vld [vmem:[%s6 + $0x10] sm:$0xff]
    %v302 = vld [vmem:[%s6 + $0x18] sm:$0xff]
    %304 = vset.pattern.permute.xlu0 0
    %305 = vperm.xlu0 %304, %v299
    %v306 = vpop.permute.xlu0 %305
    %309 = vset.pattern.permute.xlu0 0
    %310 = vperm.xlu0 %309, %v300
    %v311 = vpop.permute.xlu0 %310
    %314 = vset.pattern.permute.xlu0 0
    %315 = vperm.xlu0 %314, %v301
    %v316 = vpop.permute.xlu0 %315
    %319 = vset.pattern.permute.xlu0 0
    %320 = vperm.xlu0 %319, %v302
    %v321 = vpop.permute.xlu0 %320
    %v324 = vsel %vm193, %v295, 0
    %v327 = vsel %vm193, %v296, 0
    %v330 = vsel %vm193, %v297, 0
    %v333 = vsel %vm193, %v298, 0
    %335 = vmatprep.subr.mxu0 0.0
    %336 = vmatpush1.msra.mxu0 0.0
    %337 = vmatprep.subr.mxu0 0.0
    %338 = vmatpush1.msra.mxu0 0.0
    %339 = vmatprep.subr.mxu0 0.0
    %340 = vmatpush1.msra.mxu0 0.0
    %341 = vmatprep.subr.mxu0 0.0
    %342 = vmatpush1.msra.mxu0 0.0
    %343 = vmatprep.subr.mxu0 0.0
    %344 = vmatpush1.msra.mxu0 0.0
    %345 = vmatprep.subr.mxu0 0.0
    %346 = vmatpush1.msra.mxu0 0.0
    %347 = vmatprep.subr.mxu0 0.0
    %348 = vmatpush1.msra.mxu0 0.0
    %349 = vmatprep.subr.mxu0 0.0
    %350 = vmatpush1.msra.mxu0 0.0
    %351 = vmatprep.subr.mxu0 0.0
    %352 = vmatpush1.msra.mxu0 0.0
    %353 = vmatprep.subr.mxu0 0.0
    %354 = vmatpush1.msra.mxu0 0.0
    %355 = vmatprep.subr.mxu0 0.0
    %356 = vmatpush1.msra.mxu0 0.0
    %357 = vmatprep.subr.mxu0 0.0
    %358 = vmatpush1.msra.mxu0 0.0
    %359 = vmatprep.subr.mxu0 0.0
    %360 = vmatpush1.msra.mxu0 %v294
    %361 = vmatprep.subr.mxu0 0.0
    %362 = vmatpush1.msra.mxu0 %v293
    %363 = vmatprep.subr.mxu0 0.0
    %364 = vmatpush1.msra.mxu0 %v292
    %365 = vmatprep.subr.mxu0 0.0
    %366 = vmatpush1.msra.mxu0 %v291
    %367 = vmatprep.subr.mxu0 0.0
    %368 = vmatpush2.msra.mxu0 0.0
    %369 = vmatprep.subr.mxu0 0.0
    %370 = vmatpush2.msra.mxu0 0.0
    %371 = vmatprep.subr.mxu0 0.0
    %372 = vmatpush2.msra.mxu0 0.0
    %373 = vmatprep.subr.mxu0 0.0
    %374 = vmatpush2.msra.mxu0 0.0
    %375 = vmatprep.subr.mxu0 0.0
    %376 = vmatpush2.msra.mxu0 0.0
    %377 = vmatprep.subr.mxu0 0.0
    %378 = vmatpush2.msra.mxu0 0.0
    %379 = vmatprep.subr.mxu0 0.0
    %380 = vmatpush2.msra.mxu0 0.0
    %381 = vmatprep.subr.mxu0 0.0
    %382 = vmatpush2.msra.mxu0 0.0
    %383 = vmatprep.subr.mxu0 0.0
    %384 = vmatpush2.msra.mxu0 0.0
    %385 = vmatprep.subr.mxu0 0.0
    %386 = vmatpush2.msra.mxu0 0.0
    %387 = vmatprep.subr.mxu0 0.0
    %388 = vmatpush2.msra.mxu0 0.0
    %389 = vmatprep.subr.mxu0 0.0
    %390 = vmatpush2.msra.mxu0 0.0
    %391 = vmatprep.subr.mxu0 0.0
    %392 = vmatpush2.msra.mxu0 0.0
    %393 = vmatprep.subr.mxu0 0.0
    %394 = vmatpush2.msra.mxu0 0.0
    %395 = vmatprep.subr.mxu0 0.0
    %396 = vmatpush2.msra.mxu0 0.0
    %397 = vmatprep.subr.mxu0 0.0
    %398 = vmatpush2.msra.mxu0 0.0
    %399 = vmatprep.mubr.f32.mxu0 0.0
    %400 = vmatmul.mubr.f32.gmra.mxu0 %v324
    %v401 = vpop.f32.mrf.mxu0
    %v402 = vadd.f32 %v306, %v401
    %v403 = vpop.f32.mrf.mxu0
    %404 = vmatprep.mubr.f32.mxu0 0.0
    %405 = vmatmul.mubr.f32.gmra.mxu0 %v327
    %v406 = vpop.f32.mrf.mxu0
    %v407 = vadd.f32 %v311, %v406
    %v408 = vpop.f32.mrf.mxu0
    %409 = vmatprep.mubr.f32.mxu0 0.0
    %410 = vmatmul.mubr.f32.gmra.mxu0 %v330
    %v411 = vpop.f32.mrf.mxu0
    %v412 = vadd.f32 %v316, %v411
    %v413 = vpop.f32.mrf.mxu0
    %414 = vmatprep.mubr.f32.mxu0 0.0
    %415 = vmatmul.mubr.f32.gmra.mxu0 %v333
    %v416 = vpop.f32.mrf.mxu0
    %v417 = vadd.f32 %v321, %v416
    %v418 = vpop.f32.mrf.mxu0
    %419 = vdwg.mxu0
    %v420 = vtanh.pop %v402
    %v421 = vtanh.pop %v407
    %v422 = vtanh.pop %v412
    %v423 = vtanh.pop %v417
    %v424 = vld [vmem:[%s7] sm:$0xff]
    %v425 = vld [vmem:[%s8] sm:$0xff]
    %427 = vset.pattern.permute.xlu0 0
    %428 = vperm.xlu0 %427, %v425
    %v429 = vpop.permute.xlu0 %428
    %v432 = vsel %vm193, %v424, 0
    %434 = vmatprep.subr.mxu0 0.0
    %435 = vmatpush1.msra.mxu0 0.0
    %436 = vmatprep.subr.mxu0 0.0
    %437 = vmatpush1.msra.mxu0 0.0
    %438 = vmatprep.subr.mxu0 0.0
    %439 = vmatpush1.msra.mxu0 0.0
    %440 = vmatprep.subr.mxu0 0.0
    %441 = vmatpush1.msra.mxu0 0.0
    %442 = vmatprep.subr.mxu0 0.0
    %443 = vmatpush1.msra.mxu0 0.0
    %444 = vmatprep.subr.mxu0 0.0
    %445 = vmatpush1.msra.mxu0 0.0
    %446 = vmatprep.subr.mxu0 0.0
    %447 = vmatpush1.msra.mxu0 0.0
    %448 = vmatprep.subr.mxu0 0.0
    %449 = vmatpush1.msra.mxu0 0.0
    %450 = vmatprep.subr.mxu0 0.0
    %451 = vmatpush1.msra.mxu0 0.0
    %452 = vmatprep.subr.mxu0 0.0
    %453 = vmatpush1.msra.mxu0 0.0
    %454 = vmatprep.subr.mxu0 0.0
    %455 = vmatpush1.msra.mxu0 0.0
    %456 = vmatprep.subr.mxu0 0.0
    %457 = vmatpush1.msra.mxu0 0.0
    %458 = vmatprep.subr.mxu0 0.0
    %459 = vmatpush1.msra.mxu0 %v423
    %460 = vmatprep.subr.mxu0 0.0
    %461 = vmatpush1.msra.mxu0 %v422
    %462 = vmatprep.subr.mxu0 0.0
    %463 = vmatpush1.msra.mxu0 %v421
    %464 = vmatprep.subr.mxu0 0.0
    %465 = vmatpush1.msra.mxu0 %v420
    %466 = vmatprep.subr.mxu0 0.0
    %467 = vmatpush2.msra.mxu0 0.0
    %468 = vmatprep.subr.mxu0 0.0
    %469 = vmatpush2.msra.mxu0 0.0
    %470 = vmatprep.subr.mxu0 0.0
    %471 = vmatpush2.msra.mxu0 0.0
    %472 = vmatprep.subr.mxu0 0.0
    %473 = vmatpush2.msra.mxu0 0.0
    %474 = vmatprep.subr.mxu0 0.0
    %475 = vmatpush2.msra.mxu0 0.0
    %476 = vmatprep.subr.mxu0 0.0
    %477 = vmatpush2.msra.mxu0 0.0
    %478 = vmatprep.subr.mxu0 0.0
    %479 = vmatpush2.msra.mxu0 0.0
    %480 = vmatprep.subr.mxu0 0.0
    %481 = vmatpush2.msra.mxu0 0.0
    %482 = vmatprep.subr.mxu0 0.0
    %483 = vmatpush2.msra.mxu0 0.0
    %484 = vmatprep.subr.mxu0 0.0
    %485 = vmatpush2.msra.mxu0 0.0
    %486 = vmatprep.subr.mxu0 0.0
    %487 = vmatpush2.msra.mxu0 0.0
    %488 = vmatprep.subr.mxu0 0.0
    %489 = vmatpush2.msra.mxu0 0.0
    %490 = vmatprep.subr.mxu0 0.0
    %491 = vmatpush2.msra.mxu0 0.0
    %492 = vmatprep.subr.mxu0 0.0
    %493 = vmatpush2.msra.mxu0 0.0
    %494 = vmatprep.subr.mxu0 0.0
    %495 = vmatpush2.msra.mxu0 0.0
    %496 = vmatprep.subr.mxu0 0.0
    %497 = vmatpush2.msra.mxu0 0.0
    %498 = vmatprep.mubr.f32.mxu0 0.0
    %499 = vmatmul.mubr.f32.gmra.mxu0 %v432
    %v500 = vpop.f32.mrf.mxu0
    %v501 = vadd.f32 %v429, %v500
    %v502 = vpop.f32.mrf.mxu0
    %503 = vdwg.mxu0
    %v504 = vmax.f32 %v501, 0.0
    %v505 = vand.u32 2147483647, %v501
    %v506 = vsub.f32 0.0, %v505
    %v507 = vmul.f32 %v506, 1.442695
    %v508 = vpow.pop %v507
    %v509 = vadd.f32 %v508, 1.0
    %v510 = vlog2.pop %v509
    %v511 = vmul.f32 %v510, 0.6931472
    %v512 = vadd.f32 %v504, %v511
    %v513 = vadd.f32 %v512, 1.0
    %514 = vst.msk [vmem:[#allocation2] sm:$0xff] %vm63, %v513
    // Predicated region
    $region38: #{tpu_custom_call.1} parent=1 // pred_check
      _
    $region39: #{tpu_custom_call.1} parent=1 // pred_check_branch
      %516 = sbr.rel (0) target = $region41
    $region40: #{tpu_custom_call.1} parent=1 // pred_region
      %s518 = ssub.s32 128, 128
      %519 = vsyncadd [#allocation3], %s518
      %s521 = sshll.u32 [#allocation2], 4
      %s522 = int_to_ptr.vmem [resolvable:$true] %s521
      %524 = dma.vmem_to_hbm [thread:$0]  %s522, 128, %s9, [#allocation3]
    $region41: #{tpu_custom_call.1} parent=1 // pred_fallthru
      _
    // Predicated region
    $region42: #{tpu_custom_call.1} parent=1 // pred_check
      _
    $region43: #{tpu_custom_call.1} parent=1 // pred_check_branch
      %526 = sbr.rel (0) target = $region45
    $region44: #{tpu_custom_call.1} parent=1 // pred_region
      %527 = dma.done [#allocation3], 128
    $region45: #{tpu_custom_call.1} parent=1 // pred_fallthru
      _
    %528 = vsyncpa [#allocation3], 1

</llo_original>
